<compile_context>
chip_gen: v7x
topology: tpu7x:2x2x1
jax: 0.10.0
libtpu: 0.0.40
codegen_flags: <defaults>
</compile_context>

<pallas_src>
import functools

import jax
import jax.numpy as jnp
from jax.experimental import pallas as pl
from jax.experimental.pallas import tpu as pltpu


_TARGET_BLOCK_BYTES = 4 * 1024 * 1024   # mem-bound tiling saturates HBM ~1-4 MiB
_MIN_GRID_STEPS = 8                      # >= 3-4 steps per TensorCore (v7x has 2 TCs)


# ----------------------------------------------------------------------------
# Fused single-pass kernel: pooling + MLP + sigmoid + rescale.
# x block: (bt, C, HW); weights pre-transposed (C, hidden) / (hidden, C).
# ----------------------------------------------------------------------------
def _fused_kernel(x_ref, w1_ref, b1_ref, w2_ref, b2_ref, o_ref, *, true_hw):
    x = x_ref[...]                                            # (bt, C, HW), input dtype
    x_sum = jnp.sum(x, axis=-1, dtype=jnp.float32)            # f32 accumulation
    x_max = jnp.max(x, axis=-1).astype(jnp.float32)           # (bt, C)
    x_avg = x_sum * (1.0 / float(true_hw))

    # Stack avg/max rows -> one matmul per MLP layer instead of two.
    pooled = jnp.concatenate([x_avg, x_max], axis=0)          # (2*bt, C)
    h = jnp.dot(pooled, w1_ref[...], preferred_element_type=jnp.float32) + b1_ref[...]
    h = jnp.maximum(h, 0.0)
    att = jnp.dot(h, w2_ref[...], preferred_element_type=jnp.float32) + b2_ref[...]
    bt = x.shape[0]
    scale = jax.nn.sigmoid(att[:bt] + att[bt:])               # (bt, C) f32

    # Rescale in the input dtype (no whole-block f32 temp).
    o_ref[...] = (x * scale.astype(x.dtype)[:, :, None]).astype(o_ref.dtype)


# ----------------------------------------------------------------------------
# Two-pass fallback, pass 1: streaming pooling + MLP + sigmoid -> (B, 1, C).
# Only the final (partial) spatial tile pays for masking.
# ----------------------------------------------------------------------------
def _pool_mlp_kernel(x_ref, w1_ref, b1_ref, w2_ref, b2_ref, scale_ref,
                     sum_sc, max_sc, *, true_hw, hw_tile, rem):
    h_idx = pl.program_id(1)
    n_hw = pl.num_programs(1)

    @pl.when(h_idx == 0)
    def _():
        sum_sc[...] = jnp.zeros_like(sum_sc)
        max_sc[...] = jnp.full_like(max_sc, -jnp.inf)

    def accumulate_full():
        x = x_ref[...]                                        # (1, C, hw_tile)
        sum_sc[...] += jnp.sum(x, axis=-1, dtype=jnp.float32)
        max_sc[...] = jnp.maximum(max_sc[...],
                                  jnp.max(x, axis=-1).astype(jnp.float32))

    if rem:
        @pl.when(h_idx < n_hw - 1)
        def _():
            accumulate_full()

        @pl.when(h_idx == n_hw - 1)
        def _():
            x = x_ref[...]
            lane = jax.lax.broadcasted_iota(jnp.int32, (1, 1, hw_tile), 2)
            valid = lane < rem
            x_sum = jnp.sum(jnp.where(valid, x, jnp.zeros((), x.dtype)),
                            axis=-1, dtype=jnp.float32)
            x_max = jnp.max(jnp.where(valid, x, jnp.full((), -jnp.inf, x.dtype)),
                            axis=-1).astype(jnp.float32)
            sum_sc[...] += x_sum
            max_sc[...] = jnp.maximum(max_sc[...], x_max)
    else:
        accumulate_full()

    @pl.when(h_idx == n_hw - 1)
    def _():
        avg = sum_sc[...] * (1.0 / float(true_hw))            # (1, C)
        pooled = jnp.concatenate([avg, max_sc[...]], axis=0)  # (2, C)
        hid = jnp.dot(pooled, w1_ref[...], preferred_element_type=jnp.float32) + b1_ref[...]
        hid = jnp.maximum(hid, 0.0)
        att = jnp.dot(hid, w2_ref[...], preferred_element_type=jnp.float32) + b2_ref[...]
        scale = jax.nn.sigmoid(att[0:1] + att[1:2])           # (1, C)
        scale_ref[...] = scale[None]                          # (1, 1, C)


# ----------------------------------------------------------------------------
# Two-pass fallback, pass 2: broadcast channel rescale (scale has C on sublanes).
# ----------------------------------------------------------------------------
def _rescale_kernel(x_ref, scale_ref, o_ref):
    x = x_ref[...]                                            # (1, C, hw_tile)
    s = scale_ref[...].astype(x.dtype)                        # (1, C, 1)
    o_ref[...] = (x * s).astype(o_ref.dtype)


# ----------------------------------------------------------------------------
# Wrapper
# ----------------------------------------------------------------------------
def _vmem_cap():
    try:
        info = pltpu.get_tpu_info()
        cap = getattr(info, "vmem_capacity_bytes", None)
        if cap:
            return int(cap) * 3 // 4
    except Exception:
        pass
    return 48 * 1024 * 1024          # 3/4 of v7x's 64 MiB -- conservative default


def channel_gate(x, w1, b1, w2, b2, *, force_two_pass=False, fused_bt=None,
                 two_pass_hw_tile=None):
    """x: (B, C, H, W). w1: (hidden, C), b1: (hidden,), w2: (C, hidden), b2: (C,)."""
    B, C, H, W = x.shape
    HW = H * W
    hidden = w1.shape[0]
    itemsize = jnp.dtype(x.dtype).itemsize

    # Pre-transposed params (f32) so the kernel does (rows, C) @ (C, hidden).
    w1t = jnp.transpose(w1).astype(jnp.float32)   # (C, hidden)
    w2t = jnp.transpose(w2).astype(jnp.float32)   # (hidden, C)
    b1r = b1.reshape(1, hidden).astype(jnp.float32)
    b2r = b2.reshape(1, C).astype(jnp.float32)
    weight_bytes = 4 * (w1t.size + w2t.size + b1r.size + b2r.size)

    x3 = x.reshape(B, C, HW)
    plane_bytes = C * HW * itemsize
    cap = _vmem_cap()

    # Fused path needs one (>=1, C, HW) block double-buffered for input and output.
    use_fused = (not force_two_pass) and \
        (4 * plane_bytes + 2 * weight_bytes + (1 << 20) <= cap)

    if use_fused:
        # Block sizing: cap block bytes at the HBM-roofline sweet spot, and keep
        # the grid deep enough for DMA/compute overlap + megacore sharding.
        bt_bytes = max(1, _TARGET_BLOCK_BYTES // plane_bytes)
        bt_depth = max(1, B // _MIN_GRID_STEPS)
        bt = max(1, min(B, bt_bytes, bt_depth))
        if fused_bt is not None:
            bt = int(fused_bt)
        grid = (-(-B // bt),)                 # partial trailing batch block is fine

        block_bytes = bt * plane_bytes
        vmem_limit = int(max(4 * block_bytes + 2 * weight_bytes + (8 << 20),
                             32 << 20))

        cost = pl.CostEstimate(
            flops=int(3 * B * C * HW + 8 * B * C * hidden),
            transcendentals=int(B * C),
            bytes_accessed=int(2 * B * C * HW * itemsize + weight_bytes),
        )

        out = pl.pallas_call(
            functools.partial(_fused_kernel, true_hw=HW),
            out_shape=jax.ShapeDtypeStruct((B, C, HW), x.dtype),
            grid_spec=pltpu.PrefetchScalarGridSpec(
                num_scalar_prefetch=0,
                grid=grid,
                in_specs=[
                    pl.BlockSpec((bt, C, HW), lambda i: (i, 0, 0)),
                    pl.BlockSpec((C, hidden), lambda i: (0, 0)),
                    pl.BlockSpec((1, hidden), lambda i: (0, 0)),
                    pl.BlockSpec((hidden, C), lambda i: (0, 0)),
                    pl.BlockSpec((1, C), lambda i: (0, 0)),
                ],
                out_specs=pl.BlockSpec((bt, C, HW), lambda i: (i, 0, 0)),
            ),
            compiler_params=pltpu.CompilerParams(
                dimension_semantics=("parallel",),
                vmem_limit_bytes=vmem_limit,
            ),
            cost_estimate=cost,
        )(x3, w1t, b1r, w2t, b2r)
        return out.reshape(B, C, H, W)

    # ---------------- two-pass fallback (plane too large for VMEM) -----------
    def pick_hw_tile(target_bytes):
        per_lane = C * itemsize
        t = max(1, target_bytes // per_lane)
        if t >= HW:
            return HW                          # full-extent dim: no 128 constraint
        return max(128, (t // 128) * 128)

    # Pass 1: pooled stats + MLP + sigmoid -> per-channel scale (B, 1, C).
    hw_tile_a = int(two_pass_hw_tile or pick_hw_tile(_TARGET_BLOCK_BYTES))
    n_hw_a = -(-HW // hw_tile_a)
    rem_a = HW % hw_tile_a
    vmem_a = int(max(2 * C * hw_tile_a * itemsize + 2 * weight_bytes + (8 << 20),
                     32 << 20))

    scale = pl.pallas_call(
        functools.partial(_pool_mlp_kernel, true_hw=HW, hw_tile=hw_tile_a, rem=rem_a),
        out_shape=jax.ShapeDtypeStruct((B, 1, C), jnp.float32),
        grid_spec=pltpu.PrefetchScalarGridSpec(
            num_scalar_prefetch=0,
            grid=(B, n_hw_a),
            in_specs=[
                pl.BlockSpec((1, C, hw_tile_a), lambda b, h: (b, 0, h)),
                pl.BlockSpec((C, hidden), lambda b, h: (0, 0)),
                pl.BlockSpec((1, hidden), lambda b, h: (0, 0)),
                pl.BlockSpec((hidden, C), lambda b, h: (0, 0)),
                pl.BlockSpec((1, C), lambda b, h: (0, 0)),
            ],
            out_specs=pl.BlockSpec((1, 1, C), lambda b, h: (b, 0, 0)),
            scratch_shapes=[pltpu.VMEM((1, C), jnp.float32),
                            pltpu.VMEM((1, C), jnp.float32)],
        ),
        compiler_params=pltpu.CompilerParams(
            dimension_semantics=("parallel", "arbitrary"),
            vmem_limit_bytes=vmem_a,
        ),
        cost_estimate=pl.CostEstimate(
            flops=int(2 * B * C * HW + 8 * B * C * hidden),
            transcendentals=int(B * C),
            bytes_accessed=int(B * C * HW * itemsize + weight_bytes),
        ),
    )(x3, w1t, b1r, w2t, b2r)

    # One-time tiny relayout outside the hot loop: C onto the sublane axis.
    scale_c1 = scale.reshape(B, C, 1)

    # Pass 2: broadcast rescale.
    hw_tile_b = int(two_pass_hw_tile or pick_hw_tile(_TARGET_BLOCK_BYTES))
    n_hw_b = -(-HW // hw_tile_b)
    vmem_b = int(max(4 * C * hw_tile_b * itemsize + (8 << 20), 32 << 20))

    out = pl.pallas_call(
        _rescale_kernel,
        out_shape=jax.ShapeDtypeStruct((B, C, HW), x.dtype),
        grid_spec=pltpu.PrefetchScalarGridSpec(
            num_scalar_prefetch=0,
            grid=(B, n_hw_b),
            in_specs=[
                pl.BlockSpec((1, C, hw_tile_b), lambda b, h: (b, 0, h)),
                pl.BlockSpec((1, C, 1), lambda b, h: (b, 0, 0)),
            ],
            out_specs=pl.BlockSpec((1, C, hw_tile_b), lambda b, h: (b, 0, h)),
        ),
        compiler_params=pltpu.CompilerParams(
            dimension_semantics=("parallel", "parallel"),
            vmem_limit_bytes=vmem_b,
        ),
        cost_estimate=pl.CostEstimate(
            flops=int(B * C * HW),
            transcendentals=0,
            bytes_accessed=int(2 * B * C * HW * itemsize),
        ),
    )(x3, scale_c1)
    return out.reshape(B, C, H, W)


def channel_gate_ref(x, w1, b1, w2, b2):
    """Pure-JAX reference replicating the PyTorch forward (avg + max pools)."""
    B, C, H, W = x.shape
    xf = x.reshape(B, C, -1)
    avg_pool = jnp.mean(xf, axis=-1)
    max_pool = jnp.max(xf, axis=-1)

    def mlp(p):
        h = jnp.maximum(p @ w1.T + b1, 0.0)
        return h @ w2.T + b2

    att = mlp(avg_pool) + mlp(max_pool)
    scale = jax.nn.sigmoid(att)[:, :, None, None]
    return x * scale


# TODO(synk): the optional 'lp' and 'lse' pool branches of ChannelGate are not
# implemented; the module's default pool_types=['avg','max'] is fully covered.

if __name__ == "__main__":
    root = jax.random.PRNGKey(0)
    keys = jax.random.split(root, 3)

    def make_inputs(B, C, H, W, reduction_ratio, key):
        hidden = max(1, C // reduction_ratio)
        kx, k1, k2, k3, k4 = jax.random.split(key, 5)
        x = jax.random.normal(kx, (B, C, H, W), dtype=jnp.float32)
        w1 = jax.random.normal(k1, (hidden, C), dtype=jnp.float32) * 0.1
        b1 = jax.random.normal(k2, (hidden,), dtype=jnp.float32) * 0.1
        w2 = jax.random.normal(k3, (C, hidden), dtype=jnp.float32) * 0.1
        b2 = jax.random.normal(k4, (C,), dtype=jnp.float32) * 0.1
        return x, w1, b1, w2, b2

    ok = True

    # Case 1: lane-aligned plane (16x16 -> HW=256), fused single-pass path.
    x, w1, b1, w2, b2 = make_inputs(2, 64, 16, 16, 16, keys[0])
    out = jax.block_until_ready(channel_gate(x, w1, b1, w2, b2))
    ref = channel_gate_ref(x, w1, b1, w2, b2)
    ok &= bool(jnp.allclose(out, ref, atol=1e-5, rtol=1e-5))

    # Case 2: non-128-aligned plane (7x7) -> fused path with full-HW block (no pad).
    x2, w12, b12, w22, b22 = make_inputs(2, 64, 7, 7, 16, keys[1])
    out2 = jax.block_until_ready(channel_gate(x2, w12, b12, w22, b22))
    ref2 = channel_gate_ref(x2, w12, b12, w22, b22)
    ok &= bool(jnp.allclose(out2, ref2, atol=1e-5, rtol=1e-5))

    # Case 3: partial trailing batch block (B=3, bt=2) on an unaligned plane.
    x3_, w13, b13, w23, b23 = make_inputs(3, 32, 10, 10, 8, keys[2])
    out3 = jax.block_until_ready(channel_gate(x3_, w13, b13, w23, b23, fused_bt=2))
    ref3 = channel_gate_ref(x3_, w13, b13, w23, b23)
    ok &= bool(jnp.allclose(out3, ref3, atol=1e-5, rtol=1e-5))

    # Case 4: two-pass VMEM-guard fallback on an aligned plane (no tail mask).
    out4 = jax.block_until_ready(channel_gate(x, w1, b1, w2, b2, force_two_pass=True))
    ok &= bool(jnp.allclose(out4, ref, atol=1e-5, rtol=1e-5))

    # Case 5: two-pass fallback with a masked partial tail tile (HW=324, tile=128).
    x5, w15, b15, w25, b25 = make_inputs(2, 64, 18, 18, 16, keys[1])
    out5 = jax.block_until_ready(
        channel_gate(x5, w15, b15, w25, b25, force_two_pass=True, two_pass_hw_tile=128))
    ref5 = channel_gate_ref(x5, w15, b15, w25, b25)
    ok &= bool(jnp.allclose(out5, ref5, atol=1e-5, rtol=1e-5))

    assert ok, "mismatch vs JAX reference"
    print("KERNEL_OK")
</pallas_src>

<mosaic_0001>
module attributes {stable_mosaic.version = 11 : i64} {
  func.func @_fused_kernel(%arg0: i32, %arg1: memref<1x64x256xf32, #tpu.memory_space<vmem>>, %arg2: memref<64x4xf32, #tpu.memory_space<vmem>>, %arg3: memref<1x4xf32, #tpu.memory_space<vmem>>, %arg4: memref<4x64xf32, #tpu.memory_space<vmem>>, %arg5: memref<1x64xf32, #tpu.memory_space<vmem>>, %arg6: memref<1x64x256xf32, #tpu.memory_space<vmem>>) attributes {dimension_semantics = [#tpu.dimension_semantics<parallel>], iteration_bounds = array<i64: 2>, scalar_prefetch = 0 : i64, scratch_operands = 0 : i64, tpu.core_type = #tpu.core_type<tc>, window_params = [{transform_indices = @transform_0, window_bounds = array<i64: 1, 64, 256>}, {pipeline_mode = #tpu.pipeline_mode<synchronous>, transform_indices = @transform_1, window_bounds = array<i64: 64, 4>}, {pipeline_mode = #tpu.pipeline_mode<synchronous>, transform_indices = @transform_2, window_bounds = array<i64: 1, 4>}, {pipeline_mode = #tpu.pipeline_mode<synchronous>, transform_indices = @transform_3, window_bounds = array<i64: 4, 64>}, {pipeline_mode = #tpu.pipeline_mode<synchronous>, transform_indices = @transform_4, window_bounds = array<i64: 1, 64>}, {transform_indices = @transform_5, window_bounds = array<i64: 1, 64, 256>}]} {
    %c0 = arith.constant 0 : index
    %c0_0 = arith.constant 0 : index
    %c0_1 = arith.constant 0 : index
    %0 = vector.load %arg1[%c0, %c0_0, %c0_1] : memref<1x64x256xf32, #tpu.memory_space<vmem>>, vector<1x64x256xf32>
    %cst = arith.constant dense<0.000000e+00> : vector<1x64xf32>
    %1 = vector.multi_reduction <add>, %0, %cst [2] : vector<1x64x256xf32> to vector<1x64xf32>
    %cst_2 = arith.constant dense<0xFF800000> : vector<1x64xf32>
    %2 = vector.multi_reduction <maximumf>, %0, %cst_2 [2] : vector<1x64x256xf32> to vector<1x64xf32>
    %cst_3 = arith.constant 3.906250e-03 : f32
    %3 = vector.broadcast %cst_3 : f32 to vector<1x64xf32>
    %4 = arith.mulf %1, %3 : vector<1x64xf32>
    %5 = tpu.concatenate %4, %2 in 0 : vector<1x64xf32>, vector<1x64xf32> -> vector<2x64xf32>
    %c0_4 = arith.constant 0 : index
    %c0_5 = arith.constant 0 : index
    %6 = vector.load %arg2[%c0_4, %c0_5] : memref<64x4xf32, #tpu.memory_space<vmem>>, vector<64x4xf32>
    %cst_6 = arith.constant dense<0.000000e+00> : vector<2x4xf32>
    %7 = tpu.matmul %5, %6, %cst_6 {dimension_numbers = #tpu.dot_dimension_numbers<[1], [0], [0], [1], [0, 0, 1, 1], [], []>} : vector<2x64xf32>, vector<64x4xf32>, vector<2x4xf32> -> vector<2x4xf32>
    %c0_7 = arith.constant 0 : index
    %c0_8 = arith.constant 0 : index
    %8 = vector.load %arg3[%c0_7, %c0_8] : memref<1x4xf32, #tpu.memory_space<vmem>>, vector<1x4xf32>
    %9 = vector.broadcast %8 : vector<1x4xf32> to vector<2x4xf32>
    %10 = arith.addf %7, %9 : vector<2x4xf32>
    %cst_9 = arith.constant 0.000000e+00 : f32
    %11 = vector.broadcast %cst_9 : f32 to vector<2x4xf32>
    %12 = arith.maximumf %10, %11 : vector<2x4xf32>
    %c0_10 = arith.constant 0 : index
    %c0_11 = arith.constant 0 : index
    %13 = vector.load %arg4[%c0_10, %c0_11] : memref<4x64xf32, #tpu.memory_space<vmem>>, vector<4x64xf32>
    %cst_12 = arith.constant dense<0.000000e+00> : vector<2x64xf32>
    %14 = tpu.matmul %12, %13, %cst_12 {dimension_numbers = #tpu.dot_dimension_numbers<[1], [0], [0], [1], [0, 0, 1, 1], [], []>} : vector<2x4xf32>, vector<4x64xf32>, vector<2x64xf32> -> vector<2x64xf32>
    %c0_13 = arith.constant 0 : index
    %c0_14 = arith.constant 0 : index
    %15 = vector.load %arg5[%c0_13, %c0_14] : memref<1x64xf32, #tpu.memory_space<vmem>>, vector<1x64xf32>
    %16 = vector.broadcast %15 : vector<1x64xf32> to vector<2x64xf32>
    %17 = arith.addf %14, %16 : vector<2x64xf32>
    %18 = vector.extract_strided_slice %17 {offsets = [0, 0], sizes = [1, 64], strides = [1, 1]} : vector<2x64xf32> to vector<1x64xf32>
    %19 = vector.extract_strided_slice %17 {offsets = [1, 0], sizes = [1, 64], strides = [1, 1]} : vector<2x64xf32> to vector<1x64xf32>
    %20 = arith.addf %18, %19 : vector<1x64xf32>
    %21 = arith.negf %20 : vector<1x64xf32>
    %22 = math.exp %21 : vector<1x64xf32>
    %cst_15 = arith.constant 1.000000e+00 : f32
    %23 = vector.broadcast %cst_15 : f32 to vector<1x64xf32>
    %24 = arith.addf %23, %22 : vector<1x64xf32>
    %25 = arith.divf %23, %24 : vector<1x64xf32>
    %26 = vector.shape_cast %25 : vector<1x64xf32> to vector<1x64x1xf32>
    %27 = vector.broadcast %26 : vector<1x64x1xf32> to vector<1x64x256xf32>
    %28 = arith.mulf %0, %27 : vector<1x64x256xf32>
    %c0_16 = arith.constant 0 : index
    %c0_17 = arith.constant 0 : index
    %c0_18 = arith.constant 0 : index
    %29 = vector.load %arg6[%c0_16, %c0_17, %c0_18] : memref<1x64x256xf32, #tpu.memory_space<vmem>>, vector<1x64x256xf32>
    tpu.vector_store %arg6[%c0_16, %c0_17, %c0_18], %28 {strides = array<i32>} : memref<1x64x256xf32, #tpu.memory_space<vmem>>, vector<1x64x256xf32>,
    return
  }
  func.func @transform_0(%arg0: i32) -> (i32, i32, i32) {
    %c0_i32 = arith.constant 0 : i32
    %c0_i32_0 = arith.constant 0 : i32
    %c0_i32_1 = arith.constant 0 : i32
    return %arg0, %c0_i32, %c0_i32_0 : i32, i32, i32
  }
  func.func @transform_1(%arg0: i32) -> (i32, i32) {
    %c0_i32 = arith.constant 0 : i32
    %c0_i32_0 = arith.constant 0 : i32
    %c0_i32_1 = arith.constant 0 : i32
    return %c0_i32, %c0_i32_0 : i32, i32
  }
  func.func @transform_2(%arg0: i32) -> (i32, i32) {
    %c0_i32 = arith.constant 0 : i32
    %c0_i32_0 = arith.constant 0 : i32
    %c0_i32_1 = arith.constant 0 : i32
    return %c0_i32, %c0_i32_0 : i32, i32
  }
  func.func @transform_3(%arg0: i32) -> (i32, i32) {
    %c0_i32 = arith.constant 0 : i32
    %c0_i32_0 = arith.constant 0 : i32
    %c0_i32_1 = arith.constant 0 : i32
    return %c0_i32, %c0_i32_0 : i32, i32
  }
  func.func @transform_4(%arg0: i32) -> (i32, i32) {
    %c0_i32 = arith.constant 0 : i32
    %c0_i32_0 = arith.constant 0 : i32
    %c0_i32_1 = arith.constant 0 : i32
    return %c0_i32, %c0_i32_0 : i32, i32
  }
  func.func @transform_5(%arg0: i32) -> (i32, i32, i32) {
    %c0_i32 = arith.constant 0 : i32
    %c0_i32_0 = arith.constant 0 : i32
    %c0_i32_1 = arith.constant 0 : i32
    return %arg0, %c0_i32, %c0_i32_0 : i32, i32, i32
  }
}

</mosaic_0001>

<llo_original>
// kernel: tpu_custom_call.1
$region0: #{tpu_custom_call.1}
  #allocation0 [shape = 'u32[]', space=smem, size = 0x4, offset = 0x4, fixed_abs, tag = 'smem constant byte address 0x4 - core index']
  #allocation1 [shape = 'u32[144,128]{1,0:T(1,128)}', space=vmem, size = 0x12000, scoped, tag = 'internal scratch']
  %s0 = inlined_call_operand.hbm [shape: f32[2,64,256], index: 0, kind: input, shape index: {}]
  %s1 = inlined_call_operand.vmem [shape: f32[64,4], index: 1, kind: input, shape index: {}]
  %s2 = inlined_call_operand.vmem [shape: f32[1,4], index: 2, kind: input, shape index: {}]
  %s3 = inlined_call_operand.vmem [shape: f32[4,64], index: 3, kind: input, shape index: {}]
  %s4 = inlined_call_operand.vmem [shape: f32[1,64], index: 4, kind: input, shape index: {}]
  %s5 = inlined_call_operand.hbm [shape: f32[2,64,256], index: 5, kind: output, shape index: {}]
  %s6 = sld [smem:[#allocation0]]
  $region57: #{tpu_custom_call.1} parent=0
    _
  %s8 = ssub.s32 1, %s6
  %s9 = scalar_select 0, %s8, %s6
  $region1: #{tpu_custom_call.1} parent=0
    #allocation2 [shape = 'u8[131072]{0}', space=vmem, size = 0x20000, scoped, tag = 'input window, operand 0']
    #allocation3 [shape = 's32[2]{0}', space=sflag, size = 0x8, scoped, tag = 'scoped memory for tpu_custom_call.1']
    #allocation4 [shape = 's32[2]{0}', space=sflag, size = 0x8, scoped, tag = 'scoped memory for tpu_custom_call.1']
    #allocation5 [shape = 'u8[131072]{0}', space=vmem, size = 0x20000, scoped, tag = 'output window, operand 0']
    %10 = vsyncpa [#allocation3], 0
    %s11 = scalar_lea.sflag [#allocation3], 1
    %12 = vsyncpa %s11, 0
    %13 = vsyncpa [#allocation4], 0
    %s14 = scalar_lea.sflag [#allocation4], 1
    %15 = vsyncpa %s14, 0
    loop: start=0, step=1, limit=4
    $region2: #{tpu_custom_call.1} parent=1 // loop_pre_header
      _
    $region3: #{tpu_custom_call.1} parent=1 // loop_header
      %s17 = sphi 0, %s21
      %p18 = scmp.ge.s32.totalorder %s17, 4
      %s27 = sphi 0, %s29
      %s30 = sphi 0, %s27
      %s31 = sphi 0, %s30
      %s47 = sphi 0, %s31
      %s51 = sphi 0, %s51
      %s53 = sphi 0, %s51
      %s54 = sphi 0, %s53
      %s68 = sphi 0, %s54
      %s72 = sphi 0, %s72
      %s74 = sphi 0, %s72
      %s75 = sphi 0, %s74
      %s89 = sphi 0, %s75
      %s93 = sphi 0, %s93
      %s95 = sphi 0, %s93
      %s96 = sphi 0, %s95
      %s110 = sphi 0, %s96
      %s114 = sphi 0, %s114
      %s116 = sphi 0, %s114
      %s117 = sphi 0, %s116
      %s131 = sphi 0, %s117
      %s137 = sphi 0, %s139
      %s140 = sphi 0, %s137
      %s141 = sphi 0, %s140
      %s157 = sphi 0, %s141
    $region4: #{tpu_custom_call.1} parent=1 // loop_header_branch
      %20 = sbr.rel (%p18) target = $region8
    $region5: #{tpu_custom_call.1} parent=1 // loop_body
      %s22 = ssub.s32 %s17, 1
      %s23 = ssub.s32 %s17, 2
      %s24 = sadd.s32 %s17, 1
      %s25 = ssub.s32 %s17, %s24
      %p26 = scmp.eq.s32.totalorder %s25, 0
      %s28 = sadd.s32 %s27, 1
      %s29 = scalar_select %p26, %s27, %s28
      %p32 = pneg %p26
      %p33 = scmp.eq.s32.totalorder %s17, 1
      %p34 = por %p32, %p33
      %p35 = scmp.ne.s32.totalorder %s27, %s30
      %p36 = scmp.eq.s32.totalorder %s17, 0
      %p37 = por %p35, %p36
      %p38 = scmp.ne.s32.totalorder %s27, %s30
      %p39 = scmp.eq.s32.totalorder %s22, 1
      %p40 = por %p38, %p39
      %p41 = scmp.ne.s32.totalorder %s30, %s31
      %p42 = scmp.eq.s32.totalorder %s22, 0
      %p43 = por %p41, %p42
      %p44 = scmp.ne.s32.totalorder %s30, %s31
      %p45 = scmp.eq.s32.totalorder %s23, 1
      %p46 = por %p44, %p45
      %p48 = scmp.ne.s32.totalorder %s31, %s47
      %p49 = scmp.eq.s32.totalorder %s23, 0
      %p50 = por %p48, %p49
      %s52 = sadd.s32 %s51, 1
      %p55 = scmp.eq.s32.totalorder %s17, 1
      %p56 = scmp.ne.s32.totalorder %s51, %s53
      %p57 = scmp.eq.s32.totalorder %s17, 0
      %p58 = por %p56, %p57
      %p59 = scmp.ne.s32.totalorder %s51, %s53
      %p60 = scmp.eq.s32.totalorder %s22, 1
      %p61 = por %p59, %p60
      %p62 = scmp.ne.s32.totalorder %s53, %s54
      %p63 = scmp.eq.s32.totalorder %s22, 0
      %p64 = por %p62, %p63
      %p65 = scmp.ne.s32.totalorder %s53, %s54
      %p66 = scmp.eq.s32.totalorder %s23, 1
      %p67 = por %p65, %p66
      %p69 = scmp.ne.s32.totalorder %s54, %s68
      %p70 = scmp.eq.s32.totalorder %s23, 0
      %p71 = por %p69, %p70
      %s73 = sadd.s32 %s72, 1
      %p76 = scmp.eq.s32.totalorder %s17, 1
      %p77 = scmp.ne.s32.totalorder %s72, %s74
      %p78 = scmp.eq.s32.totalorder %s17, 0
      %p79 = por %p77, %p78
      %p80 = scmp.ne.s32.totalorder %s72, %s74
      %p81 = scmp.eq.s32.totalorder %s22, 1
      %p82 = por %p80, %p81
      %p83 = scmp.ne.s32.totalorder %s74, %s75
      %p84 = scmp.eq.s32.totalorder %s22, 0
      %p85 = por %p83, %p84
      %p86 = scmp.ne.s32.totalorder %s74, %s75
      %p87 = scmp.eq.s32.totalorder %s23, 1
      %p88 = por %p86, %p87
      %p90 = scmp.ne.s32.totalorder %s75, %s89
      %p91 = scmp.eq.s32.totalorder %s23, 0
      %p92 = por %p90, %p91
      %s94 = sadd.s32 %s93, 1
      %p97 = scmp.eq.s32.totalorder %s17, 1
      %p98 = scmp.ne.s32.totalorder %s93, %s95
      %p99 = scmp.eq.s32.totalorder %s17, 0
      %p100 = por %p98, %p99
      %p101 = scmp.ne.s32.totalorder %s93, %s95
      %p102 = scmp.eq.s32.totalorder %s22, 1
      %p103 = por %p101, %p102
      %p104 = scmp.ne.s32.totalorder %s95, %s96
      %p105 = scmp.eq.s32.totalorder %s22, 0
      %p106 = por %p104, %p105
      %p107 = scmp.ne.s32.totalorder %s95, %s96
      %p108 = scmp.eq.s32.totalorder %s23, 1
      %p109 = por %p107, %p108
      %p111 = scmp.ne.s32.totalorder %s96, %s110
      %p112 = scmp.eq.s32.totalorder %s23, 0
      %p113 = por %p111, %p112
      %s115 = sadd.s32 %s114, 1
      %p118 = scmp.eq.s32.totalorder %s17, 1
      %p119 = scmp.ne.s32.totalorder %s114, %s116
      %p120 = scmp.eq.s32.totalorder %s17, 0
      %p121 = por %p119, %p120
      %p122 = scmp.ne.s32.totalorder %s114, %s116
      %p123 = scmp.eq.s32.totalorder %s22, 1
      %p124 = por %p122, %p123
      %p125 = scmp.ne.s32.totalorder %s116, %s117
      %p126 = scmp.eq.s32.totalorder %s22, 0
      %p127 = por %p125, %p126
      %p128 = scmp.ne.s32.totalorder %s116, %s117
      %p129 = scmp.eq.s32.totalorder %s23, 1
      %p130 = por %p128, %p129
      %p132 = scmp.ne.s32.totalorder %s117, %s131
      %p133 = scmp.eq.s32.totalorder %s23, 0
      %p134 = por %p132, %p133
      %s135 = ssub.s32 %s17, %s24
      %p136 = scmp.eq.s32.totalorder %s135, 0
      %s138 = sadd.s32 %s137, 1
      %s139 = scalar_select %p136, %s137, %s138
      %p142 = pneg %p136
      %p143 = scmp.eq.s32.totalorder %s17, 1
      %p144 = por %p142, %p143
      %p145 = scmp.ne.s32.totalorder %s137, %s140
      %p146 = scmp.eq.s32.totalorder %s17, 0
      %p147 = por %p145, %p146
      %p148 = scmp.ne.s32.totalorder %s137, %s140
      %p149 = scmp.eq.s32.totalorder %s22, 1
      %p150 = por %p148, %p149
      %p151 = scmp.ne.s32.totalorder %s140, %s141
      %p152 = scmp.eq.s32.totalorder %s22, 0
      %p153 = por %p151, %p152
      %p154 = scmp.ne.s32.totalorder %s140, %s141
      %p155 = scmp.eq.s32.totalorder %s23, 1
      %p156 = por %p154, %p155
      %p158 = scmp.ne.s32.totalorder %s141, %s157
      %p159 = scmp.eq.s32.totalorder %s23, 0
      %p160 = por %p158, %p159
      %p161 = scmp.le.s32.totalorder 1, %s17
      %p162 = scmp.lt.s32.totalorder %s17, 3
      %p163 = pnand %p161, %p162
      %p164 = pneg %p163
      // Predicated region
      $region9: #{tpu_custom_call.1} parent=5 // pred_check
        _
      $region10: #{tpu_custom_call.1} parent=5 // pred_check_branch
        %166 = sbr.rel (%p163) target = $region12
      $region11: #{tpu_custom_call.1} parent=5 // pred_region
        %s167 = ssub.s32 %s17, 1
        // Predicated region
        $region13: #{tpu_custom_call.1} parent=11 // pred_check
          %p168 = pneg %p64
        $region14: #{tpu_custom_call.1} parent=11 // pred_check_branch
          %170 = sbr.rel (%p168) target = $region16
        $region15: #{tpu_custom_call.1} parent=11 // pred_region
          _
        $region16: #{tpu_custom_call.1} parent=11 // pred_fallthru
          _
        // Predicated region
        $region17: #{tpu_custom_call.1} parent=11 // pred_check
          %p171 = pneg %p85
        $region18: #{tpu_custom_call.1} parent=11 // pred_check_branch
          %173 = sbr.rel (%p171) target = $region20
        $region19: #{tpu_custom_call.1} parent=11 // pred_region
          _
        $region20: #{tpu_custom_call.1} parent=11 // pred_fallthru
          _
        // Predicated region
        $region21: #{tpu_custom_call.1} parent=11 // pred_check
          %p174 = pneg %p106
        $region22: #{tpu_custom_call.1} parent=11 // pred_check_branch
          %176 = sbr.rel (%p174) target = $region24
        $region23: #{tpu_custom_call.1} parent=11 // pred_region
          _
        $region24: #{tpu_custom_call.1} parent=11 // pred_fallthru
          _
        // Predicated region
        $region25: #{tpu_custom_call.1} parent=11 // pred_check
          %p177 = pneg %p127
        $region26: #{tpu_custom_call.1} parent=11 // pred_check_branch
          %179 = sbr.rel (%p177) target = $region28
        $region27: #{tpu_custom_call.1} parent=11 // pred_region
          _
        $region28: #{tpu_custom_call.1} parent=11 // pred_fallthru
          _
      $region12: #{tpu_custom_call.1} parent=5 // pred_fallthru
        _
      %p180 = scmp.lt.s32.totalorder %s17, 2
      // Predicated region
      $region29: #{tpu_custom_call.1} parent=5 // pred_check
        %p181 = pneg %p180
      $region30: #{tpu_custom_call.1} parent=5 // pred_check_branch
        %183 = sbr.rel (%p181) target = $region32
      $region31: #{tpu_custom_call.1} parent=5 // pred_region
        // Predicated region
        $region33: #{tpu_custom_call.1} parent=31 // pred_check
          %p184 = pneg %p37
        $region34: #{tpu_custom_call.1} parent=31 // pred_check_branch
          %186 = sbr.rel (%p184) target = $region36
        $region35: #{tpu_custom_call.1} parent=31 // pred_region
          %s187 = sand.u32 %s27, 1
          %s188 = scalar_lea.sflag [#allocation3], %s187
          %s189 = sand.u32 %s27, 1
          %s190 = smul.addr %s189, 128
          %s191 = scalar_lea.vmem [#allocation2], %s190
          %s193 = ssub.s32 2048, 2048
          %194 = vsyncadd %s188, %s193
          %s195 = smul.addr %s17, 16
          %s196 = smul.addr %s195, 128
          %s197 = scalar_lea.hbm %s0, %s196
          %s198 = sshll.u32 %s191, 4
          %s199 = int_to_ptr.vmem [resolvable:$true] %s198
          %204 = dma.hbm_to_vmem [thread:$0]  %s197, 2048, %s199, %s188, 256, 256, 16
        $region36: #{tpu_custom_call.1} parent=31 // pred_fallthru
          _
      $region32: #{tpu_custom_call.1} parent=5 // pred_fallthru
        _
      %p205 = scmp.le.s32.totalorder 1, %s17
      %p206 = scmp.lt.s32.totalorder %s17, 3
      %p207 = pnand %p205, %p206
      %p208 = pneg %p207
      // Predicated region
      $region37: #{tpu_custom_call.1} parent=5 // pred_check
        _
      $region38: #{tpu_custom_call.1} parent=5 // pred_check_branch
        %210 = sbr.rel (%p207) target = $region40
      $region39: #{tpu_custom_call.1} parent=5 // pred_region
        %s211 = ssub.s32 %s17, 1
        %s212 = sand.u32 %s30, 1
        %s213 = scalar_lea.sflag [#allocation3], %s212
        %s214 = sand.u32 %s30, 1
        %s215 = smul.addr %s214, 128
        %s216 = scalar_lea.vmem [#allocation2], %s215
        // Predicated region
        $region41: #{tpu_custom_call.1} parent=39 // pred_check
          %p217 = pneg %p43
        $region42: #{tpu_custom_call.1} parent=39 // pred_check_branch
          %219 = sbr.rel (%p217) target = $region44
        $region43: #{tpu_custom_call.1} parent=39 // pred_region
          %220 = dma.done %s213, 2048
        $region44: #{tpu_custom_call.1} parent=39 // pred_fallthru
          _
        %s221 = sand.u32 %s30, 1
        %s222 = scalar_lea.sflag [#allocation3], %s221
        %s223 = sand.u32 %s30, 1
        %s224 = smul.addr %s223, 128
        %s225 = scalar_lea.vmem [#allocation2], %s224
        %p226 = pneg %p43
        %p227 = pneg %p40
        %p228 = pneg %p64
        %p229 = pneg %p61
        %p230 = pneg %p85
        %p231 = pneg %p82
        %p232 = pneg %p106
        %p233 = pneg %p103
        %p234 = pneg %p127
        %p235 = pneg %p124
        %p236 = pneg %p153
        %p237 = pneg %p150
        %s238 = sand.u32 %s140, 1
        %s239 = scalar_lea.sflag [#allocation4], %s238
        %s240 = sand.u32 %s140, 1
        %s241 = smul.addr %s240, 128
        %s242 = scalar_lea.vmem [#allocation5], %s241
        %v243 = vld [vmem:[%s216] sm:$0xff]
        %v244 = vld [vmem:[%s216 + $0x8] sm:$0xff]
        %v245 = vld [vmem:[%s216 + $0x10] sm:$0xff]
        %v246 = vld [vmem:[%s216 + $0x18] sm:$0xff]
        %v247 = vld [vmem:[%s216 + $0x20] sm:$0xff]
        %v248 = vld [vmem:[%s216 + $0x28] sm:$0xff]
        %v249 = vld [vmem:[%s216 + $0x30] sm:$0xff]
        %v250 = vld [vmem:[%s216 + $0x38] sm:$0xff]
        %v251 = vld [vmem:[%s216 + $0x40] sm:$0xff]
        %v252 = vld [vmem:[%s216 + $0x48] sm:$0xff]
        %v253 = vld [vmem:[%s216 + $0x50] sm:$0xff]
        %v254 = vld [vmem:[%s216 + $0x58] sm:$0xff]
        %v255 = vld [vmem:[%s216 + $0x60] sm:$0xff]
        %v256 = vld [vmem:[%s216 + $0x68] sm:$0xff]
        %v257 = vld [vmem:[%s216 + $0x70] sm:$0xff]
        %v258 = vld [vmem:[%s216 + $0x78] sm:$0xff]
        %v259 = vadd.f32 %v243, %v244
        %260 = vadd.xlane.f32.xlu0 %v259
        %v261 = vpop.xlane.xlu0 %260
        %v262 = vadd.f32 %v245, %v246
        %263 = vadd.xlane.f32.xlu0 %v262
        %v264 = vpop.xlane.xlu0 %263
        %v265 = vadd.f32 %v247, %v248
        %266 = vadd.xlane.f32.xlu0 %v265
        %v267 = vpop.xlane.xlu0 %266
        %v268 = vadd.f32 %v249, %v250
        %269 = vadd.xlane.f32.xlu0 %v268
        %v270 = vpop.xlane.xlu0 %269
        %v271 = vadd.f32 %v251, %v252
        %272 = vadd.xlane.f32.xlu0 %v271
        %v273 = vpop.xlane.xlu0 %272
        %v274 = vadd.f32 %v253, %v254
        %275 = vadd.xlane.f32.xlu0 %v274
        %v276 = vpop.xlane.xlu0 %275
        %v277 = vadd.f32 %v255, %v256
        %278 = vadd.xlane.f32.xlu0 %v277
        %v279 = vpop.xlane.xlu0 %278
        %v280 = vadd.f32 %v257, %v258
        %281 = vadd.xlane.f32.xlu0 %v280
        %v282 = vpop.xlane.xlu0 %281
        %v283 = vmax.f32 %v243, %v244
        %284 = vmax.xlane.f32.xlu0 %v283
        %v285 = vpop.xlane.xlu0 %284
        %v286 = vmax.f32 %v245, %v246
        %287 = vmax.xlane.f32.xlu0 %v286
        %v288 = vpop.xlane.xlu0 %287
        %v289 = vmax.f32 %v247, %v248
        %290 = vmax.xlane.f32.xlu0 %v289
        %v291 = vpop.xlane.xlu0 %290
        %v292 = vmax.f32 %v249, %v250
        %293 = vmax.xlane.f32.xlu0 %v292
        %v294 = vpop.xlane.xlu0 %293
        %v295 = vmax.f32 %v251, %v252
        %296 = vmax.xlane.f32.xlu0 %v295
        %v297 = vpop.xlane.xlu0 %296
        %v298 = vmax.f32 %v253, %v254
        %299 = vmax.xlane.f32.xlu0 %v298
        %v300 = vpop.xlane.xlu0 %299
        %v301 = vmax.f32 %v255, %v256
        %302 = vmax.xlane.f32.xlu0 %v301
        %v303 = vpop.xlane.xlu0 %302
        %v304 = vmax.f32 %v257, %v258
        %305 = vmax.xlane.f32.xlu0 %v304
        %v306 = vpop.xlane.xlu0 %305
        %v307 = vmul.f32 %v261, 0.00390625
        %v308 = vmul.f32 %v264, 0.00390625
        %v309 = vmul.f32 %v267, 0.00390625
        %v310 = vmul.f32 %v270, 0.00390625
        %v311 = vmul.f32 %v273, 0.00390625
        %v312 = vmul.f32 %v276, 0.00390625
        %v313 = vmul.f32 %v279, 0.00390625
        %v314 = vmul.f32 %v282, 0.00390625
        %v323 = vlaneseq
        %v324 = vand.u32 %v323, 127
        %v325 = vlaneseq
        %v326 = vshrl.u32 %v325, 7
        %v327 = vsub.s32 %v324, %v326
        %v328 = vrot.slane %v307, %v327
        %v329 = vadd.s32 %v324, 4294967288
        %v330 = vlaneseq
        %v331 = vshrl.u32 %v330, 7
        %v332 = vsub.s32 %v329, %v331
        %v333 = vrot.slane %v308, %v332
        %vm334 = vcmask 130112
        %v335 = vsel %vm334, %v333, %v328
        %v336 = vadd.s32 %v324, 4294967280
        %v337 = vlaneseq
        %v338 = vshrl.u32 %v337, 7
        %v339 = vsub.s32 %v336, %v338
        %v340 = vrot.slane %v309, %v339
        %vm341 = vcmask 195712
        %v342 = vsel %vm341, %v340, %v335
        %v343 = vadd.s32 %v324, 4294967272
        %v344 = vlaneseq
        %v345 = vshrl.u32 %v344, 7
        %v346 = vsub.s32 %v343, %v345
        %v347 = vrot.slane %v310, %v346
        %vm348 = vcmask 261312
        %v349 = vsel %vm348, %v347, %v342
        %v350 = vadd.s32 %v324, 4294967264
        %v351 = vlaneseq
        %v352 = vshrl.u32 %v351, 7
        %v353 = vsub.s32 %v350, %v352
        %v354 = vrot.slane %v311, %v353
        %vm355 = vcmask 326912
        %v356 = vsel %vm355, %v354, %v349
        %v357 = vadd.s32 %v324, 4294967256
        %v358 = vlaneseq
        %v359 = vshrl.u32 %v358, 7
        %v360 = vsub.s32 %v357, %v359
        %v361 = vrot.slane %v312, %v360
        %vm362 = vcmask 392512
        %v363 = vsel %vm362, %v361, %v356
        %v364 = vadd.s32 %v324, 4294967248
        %v365 = vlaneseq
        %v366 = vshrl.u32 %v365, 7
        %v367 = vsub.s32 %v364, %v366
        %v368 = vrot.slane %v313, %v367
        %vm369 = vcmask 458112
        %v370 = vsel %vm369, %v368, %v363
        %v371 = vadd.s32 %v324, 4294967240
        %v372 = vlaneseq
        %v373 = vshrl.u32 %v372, 7
        %v374 = vsub.s32 %v371, %v373
        %v375 = vrot.slane %v314, %v374
        %vm376 = vcmask 523712
        %v377 = vsel %vm376, %v375, %v370
        %v387 = vlaneseq
        %v388 = vshrl.u32 %v387, 7
        %v389 = vsub.s32 %v324, %v388
        %v390 = vrot.slane %v285, %v389
        %v391 = vlaneseq
        %v392 = vshrl.u32 %v391, 7
        %v393 = vsub.s32 %v329, %v392
        %v394 = vrot.slane %v288, %v393
        %v395 = vsel %vm334, %v394, %v390
        %v396 = vlaneseq
        %v397 = vshrl.u32 %v396, 7
        %v398 = vsub.s32 %v336, %v397
        %v399 = vrot.slane %v291, %v398
        %v400 = vsel %vm341, %v399, %v395
        %v401 = vlaneseq
        %v402 = vshrl.u32 %v401, 7
        %v403 = vsub.s32 %v343, %v402
        %v404 = vrot.slane %v294, %v403
        %v405 = vsel %vm348, %v404, %v400
        %v406 = vlaneseq
        %v407 = vshrl.u32 %v406, 7
        %v408 = vsub.s32 %v350, %v407
        %v409 = vrot.slane %v297, %v408
        %v410 = vsel %vm355, %v409, %v405
        %v411 = vlaneseq
        %v412 = vshrl.u32 %v411, 7
        %v413 = vsub.s32 %v357, %v412
        %v414 = vrot.slane %v300, %v413
        %v415 = vsel %vm362, %v414, %v410
        %v416 = vlaneseq
        %v417 = vshrl.u32 %v416, 7
        %v418 = vsub.s32 %v364, %v417
        %v419 = vrot.slane %v303, %v418
        %v420 = vsel %vm369, %v419, %v415
        %v421 = vlaneseq
        %v422 = vshrl.u32 %v421, 7
        %v423 = vsub.s32 %v371, %v422
        %v424 = vrot.slane %v306, %v423
        %v425 = vsel %vm376, %v424, %v420
        %vm427 = vcmask 1040384
        %v428 = vsel %vm427, %v377, %v425
        %v429 = vld [vmem:[%s1] sm:$0xff]
        %v430 = vld [vmem:[%s1 + $0x8] sm:$0xff]
        %v431 = vld [vmem:[%s1 + $0x10] sm:$0xff]
        %v432 = vld [vmem:[%s1 + $0x18] sm:$0xff]
        %v433 = vld [vmem:[%s1 + $0x20] sm:$0xff]
        %v434 = vld [vmem:[%s1 + $0x28] sm:$0xff]
        %v435 = vld [vmem:[%s1 + $0x30] sm:$0xff]
        %v436 = vld [vmem:[%s1 + $0x38] sm:$0xff]
        %v437 = vld [vmem:[%s2] sm:$0x1]
        %v439 = vlaneseq
        %v440 = vshrl.u32 %v439, 7
        %v441 = vsub.s32 0, %v440
        %v442 = vrot.slane %v437, %v441
        %vm444 = vcmask 523264
        %v446 = vsel %vm444, %v428, 0
        %448 = vmatprep.subr.mxu0 0.0
        %449 = vmatpush1.msra.mxu0 %v429
        %450 = vmatprep.subr.mxu0 0.0
        %451 = vmatpush1.msra.mxu0 %v430
        %452 = vmatprep.subr.mxu0 0.0
        %453 = vmatpush1.msra.mxu0 %v431
        %454 = vmatprep.subr.mxu0 0.0
        %455 = vmatpush1.msra.mxu0 %v432
        %456 = vmatprep.subr.mxu0 0.0
        %457 = vmatpush1.msra.mxu0 %v433
        %458 = vmatprep.subr.mxu0 0.0
        %459 = vmatpush1.msra.mxu0 %v434
        %460 = vmatprep.subr.mxu0 0.0
        %461 = vmatpush1.msra.mxu0 %v435
        %462 = vmatprep.subr.mxu0 0.0
        %463 = vmatpush1.msra.mxu0 %v436
        %464 = vmatprep.subr.mxu0 0.0
        %465 = vmatpush1.msra.mxu0 0.0
        %466 = vmatprep.subr.mxu0 0.0
        %467 = vmatpush1.msra.mxu0 0.0
        %468 = vmatprep.subr.mxu0 0.0
        %469 = vmatpush1.msra.mxu0 0.0
        %470 = vmatprep.subr.mxu0 0.0
        %471 = vmatpush1.msra.mxu0 0.0
        %472 = vmatprep.subr.mxu0 0.0
        %473 = vmatpush1.msra.mxu0 0.0
        %474 = vmatprep.subr.mxu0 0.0
        %475 = vmatpush1.msra.mxu0 0.0
        %476 = vmatprep.subr.mxu0 0.0
        %477 = vmatpush1.msra.mxu0 0.0
        %478 = vmatprep.subr.mxu0 0.0
        %479 = vmatpush1.msra.mxu0 0.0
        %480 = vmatprep.subr.mxu0 0.0
        %481 = vmatpush1.msra.mxu0 0.0
        %482 = vmatprep.subr.mxu0 0.0
        %483 = vmatpush1.msra.mxu0 0.0
        %484 = vmatprep.subr.mxu0 0.0
        %485 = vmatpush1.msra.mxu0 0.0
        %486 = vmatprep.subr.mxu0 0.0
        %487 = vmatpush1.msra.mxu0 0.0
        %488 = vmatprep.subr.mxu0 0.0
        %489 = vmatpush1.msra.mxu0 0.0
        %490 = vmatprep.subr.mxu0 0.0
        %491 = vmatpush1.msra.mxu0 0.0
        %492 = vmatprep.subr.mxu0 0.0
        %493 = vmatpush1.msra.mxu0 0.0
        %494 = vmatprep.subr.mxu0 0.0
        %495 = vmatpush1.msra.mxu0 0.0
        %496 = vmatprep.subr.mxu0 0.0
        %497 = vmatpush1.msra.mxu0 0.0
        %498 = vmatprep.subr.mxu0 0.0
        %499 = vmatpush1.msra.mxu0 0.0
        %500 = vmatprep.subr.mxu0 0.0
        %501 = vmatpush1.msra.mxu0 0.0
        %502 = vmatprep.subr.mxu0 0.0
        %503 = vmatpush1.msra.mxu0 0.0
        %504 = vmatprep.subr.mxu0 0.0
        %505 = vmatpush1.msra.mxu0 0.0
        %506 = vmatprep.subr.mxu0 0.0
        %507 = vmatpush1.msra.mxu0 0.0
        %508 = vmatprep.subr.mxu0 0.0
        %509 = vmatpush1.msra.mxu0 0.0
        %510 = vmatprep.subr.mxu0 0.0
        %511 = vmatpush1.msra.mxu0 0.0
        %512 = vmatprep.mubr.f32.mxu0 0.0
        %513 = vmatmul.mubr.f32.gmra.mrb[0].mxu0 %v446
        %v514 = vpop.f32.mrb[0].mxu0
        %v515 = vadd.f32 %v442, %v514
        %v516 = vpop.f32.mrb[0].mxu0
        %517 = vdwg.mxu0
        %v518 = vmax.f32 %v515, 0.0
        %v519 = vld [vmem:[%s3] sm:$0xf]
        %v520 = vld [vmem:[%s4] sm:$0x1]
        %v522 = vlaneseq
        %v523 = vshrl.u32 %v522, 7
        %v524 = vsub.s32 0, %v523
        %v525 = vrot.slane %v520, %v524
        %vm527 = vcmask 31744
        %v529 = vsel %vm527, %v518, 0
        %vm531 = vcmask 1043456
        %v533 = vsel %vm531, %v519, 0
        %535 = vmatprep.subr.mxu0 0.0
        %536 = vmatpush1.msra.mxu0 %v533
        %537 = vmatprep.subr.mxu0 0.0
        %538 = vmatpush1.msra.mxu0 0.0
        %539 = vmatprep.subr.mxu0 0.0
        %540 = vmatpush1.msra.mxu0 0.0
        %541 = vmatprep.subr.mxu0 0.0
        %542 = vmatpush1.msra.mxu0 0.0
        %543 = vmatprep.subr.mxu0 0.0
        %544 = vmatpush1.msra.mxu0 0.0
        %545 = vmatprep.subr.mxu0 0.0
        %546 = vmatpush1.msra.mxu0 0.0
        %547 = vmatprep.subr.mxu0 0.0
        %548 = vmatpush1.msra.mxu0 0.0
        %549 = vmatprep.subr.mxu0 0.0
        %550 = vmatpush1.msra.mxu0 0.0
        %551 = vmatprep.subr.mxu0 0.0
        %552 = vmatpush1.msra.mxu0 0.0
        %553 = vmatprep.subr.mxu0 0.0
        %554 = vmatpush1.msra.mxu0 0.0
        %555 = vmatprep.subr.mxu0 0.0
        %556 = vmatpush1.msra.mxu0 0.0
        %557 = vmatprep.subr.mxu0 0.0
        %558 = vmatpush1.msra.mxu0 0.0
        %559 = vmatprep.subr.mxu0 0.0
        %560 = vmatpush1.msra.mxu0 0.0
        %561 = vmatprep.subr.mxu0 0.0
        %562 = vmatpush1.msra.mxu0 0.0
        %563 = vmatprep.subr.mxu0 0.0
        %564 = vmatpush1.msra.mxu0 0.0
        %565 = vmatprep.subr.mxu0 0.0
        %566 = vmatpush1.msra.mxu0 0.0
        %567 = vmatprep.subr.mxu0 0.0
        %568 = vmatpush1.msra.mxu0 0.0
        %569 = vmatprep.subr.mxu0 0.0
        %570 = vmatpush1.msra.mxu0 0.0
        %571 = vmatprep.subr.mxu0 0.0
        %572 = vmatpush1.msra.mxu0 0.0
        %573 = vmatprep.subr.mxu0 0.0
        %574 = vmatpush1.msra.mxu0 0.0
        %575 = vmatprep.subr.mxu0 0.0
        %576 = vmatpush1.msra.mxu0 0.0
        %577 = vmatprep.subr.mxu0 0.0
        %578 = vmatpush1.msra.mxu0 0.0
        %579 = vmatprep.subr.mxu0 0.0
        %580 = vmatpush1.msra.mxu0 0.0
        %581 = vmatprep.subr.mxu0 0.0
        %582 = vmatpush1.msra.mxu0 0.0
        %583 = vmatprep.subr.mxu0 0.0
        %584 = vmatpush1.msra.mxu0 0.0
        %585 = vmatprep.subr.mxu0 0.0
        %586 = vmatpush1.msra.mxu0 0.0
        %587 = vmatprep.subr.mxu0 0.0
        %588 = vmatpush1.msra.mxu0 0.0
        %589 = vmatprep.subr.mxu0 0.0
        %590 = vmatpush1.msra.mxu0 0.0
        %591 = vmatprep.subr.mxu0 0.0
        %592 = vmatpush1.msra.mxu0 0.0
        %593 = vmatprep.subr.mxu0 0.0
        %594 = vmatpush1.msra.mxu0 0.0
        %595 = vmatprep.subr.mxu0 0.0
        %596 = vmatpush1.msra.mxu0 0.0
        %597 = vmatprep.subr.mxu0 0.0
        %598 = vmatpush1.msra.mxu0 0.0
        %599 = vmatprep.mubr.f32.mxu0 0.0
        %600 = vmatmul.mubr.f32.gmra.mrb[0].mxu0 %v529
        %v601 = vpop.f32.mrb[0].mxu0
        %v602 = vadd.f32 %v525, %v601
        %v603 = vpop.f32.mrb[0].mxu0
        %604 = vdwg.mxu0
        %v606 = vrot.slane %v602, 1
        %v608 = vadd.f32 %v602, %v606
        %v609 = vxor.u32 %v608, 2147483648
        %v610 = vmul.f32 %v609, 1.442695
        %v611 = vpow.pop %v610
        %v612 = vadd.f32 %v611, 1.0
        %v613 = vrcp.pop %v612
        %v614 = vmul.f32 1.0, %v613
        %v615 = vlaneseq
        %v616 = vshrl.u32 %v615, 7
        %v617 = vsub.s32 0, %v616
        %v618 = vrot.slane %v614, %v617
        %620 = vbcast.lane.b32.xlu0 %v618, 256
        %v621 = vpop.permute.xlu0 %620
        %s623 = sor.u32 256, 8
        %624 = vbcast.lane.b32.xlu0 %v618, %s623
        %v625 = vpop.permute.xlu0 %624
        %s627 = sor.u32 256, 16
        %628 = vbcast.lane.b32.xlu0 %v618, %s627
        %v629 = vpop.permute.xlu0 %628
        %s631 = sor.u32 256, 24
        %632 = vbcast.lane.b32.xlu0 %v618, %s631
        %v633 = vpop.permute.xlu0 %632
        %s635 = sor.u32 256, 32
        %636 = vbcast.lane.b32.xlu0 %v618, %s635
        %v637 = vpop.permute.xlu0 %636
        %s639 = sor.u32 256, 40
        %640 = vbcast.lane.b32.xlu0 %v618, %s639
        %v641 = vpop.permute.xlu0 %640
        %s643 = sor.u32 256, 48
        %644 = vbcast.lane.b32.xlu0 %v618, %s643
        %v645 = vpop.permute.xlu0 %644
        %s647 = sor.u32 256, 56
        %648 = vbcast.lane.b32.xlu0 %v618, %s647
        %v649 = vpop.permute.xlu0 %648
        %v650 = vmul.f32 %v243, %v621
        %v651 = vmul.f32 %v244, %v621
        %v652 = vmul.f32 %v245, %v625
        %v653 = vmul.f32 %v246, %v625
        %v654 = vmul.f32 %v247, %v629
        %v655 = vmul.f32 %v248, %v629
        %v656 = vmul.f32 %v249, %v633
        %v657 = vmul.f32 %v250, %v633
        %v658 = vmul.f32 %v251, %v637
        %v659 = vmul.f32 %v252, %v637
        %v660 = vmul.f32 %v253, %v641
        %v661 = vmul.f32 %v254, %v641
        %v662 = vmul.f32 %v255, %v645
        %v663 = vmul.f32 %v256, %v645
        %v664 = vmul.f32 %v257, %v649
        %v665 = vmul.f32 %v258, %v649
        %666 = vst [vmem:[%s242] sm:$0xff] %v650
        %667 = vst [vmem:[%s242 + $0x8] sm:$0xff] %v651
        %668 = vst [vmem:[%s242 + $0x10] sm:$0xff] %v652
        %669 = vst [vmem:[%s242 + $0x18] sm:$0xff] %v653
        %670 = vst [vmem:[%s242 + $0x20] sm:$0xff] %v654
        %671 = vst [vmem:[%s242 + $0x28] sm:$0xff] %v655
        %672 = vst [vmem:[%s242 + $0x30] sm:$0xff] %v656
        %673 = vst [vmem:[%s242 + $0x38] sm:$0xff] %v657
        %674 = vst [vmem:[%s242 + $0x40] sm:$0xff] %v658
        %675 = vst [vmem:[%s242 + $0x48] sm:$0xff] %v659
        %676 = vst [vmem:[%s242 + $0x50] sm:$0xff] %v660
        %677 = vst [vmem:[%s242 + $0x58] sm:$0xff] %v661
        %678 = vst [vmem:[%s242 + $0x60] sm:$0xff] %v662
        %679 = vst [vmem:[%s242 + $0x68] sm:$0xff] %v663
        %680 = vst [vmem:[%s242 + $0x70] sm:$0xff] %v664
        %681 = vst [vmem:[%s242 + $0x78] sm:$0xff] %v665
        %s682 = sand.u32 %s140, 1
        %s683 = scalar_lea.sflag [#allocation4], %s682
        %s684 = sand.u32 %s140, 1
        %s685 = smul.addr %s684, 128
        %s686 = scalar_lea.vmem [#allocation5], %s685
        // Predicated region
        $region45: #{tpu_custom_call.1} parent=39 // pred_check
          %p687 = pneg %p150
        $region46: #{tpu_custom_call.1} parent=39 // pred_check_branch
          %689 = sbr.rel (%p687) target = $region48
        $region47: #{tpu_custom_call.1} parent=39 // pred_region
          %s691 = ssub.s32 2048, 2048
          %692 = vsyncadd %s683, %s691
          %s693 = smul.addr %s22, 16
          %s694 = smul.addr %s693, 128
          %s695 = scalar_lea.hbm %s5, %s694
          %s696 = sshll.u32 %s686, 4
          %s697 = int_to_ptr.vmem [resolvable:$true] %s696
          %702 = dma.vmem_to_hbm [thread:$0]  %s697, 2048, %s695, %s683, 256, 256, 16
        $region48: #{tpu_custom_call.1} parent=39 // pred_fallthru
          _
      $region40: #{tpu_custom_call.1} parent=5 // pred_fallthru
        _
      %p703 = scmp.le.s32.totalorder 2, %s17
      // Predicated region
      $region49: #{tpu_custom_call.1} parent=5 // pred_check
        %p704 = pneg %p703
      $region50: #{tpu_custom_call.1} parent=5 // pred_check_branch
        %706 = sbr.rel (%p704) target = $region52
      $region51: #{tpu_custom_call.1} parent=5 // pred_region
        %s707 = ssub.s32 %s17, 2
        // Predicated region
        $region53: #{tpu_custom_call.1} parent=51 // pred_check
          %p708 = pneg %p156
        $region54: #{tpu_custom_call.1} parent=51 // pred_check_branch
          %710 = sbr.rel (%p708) target = $region56
        $region55: #{tpu_custom_call.1} parent=51 // pred_region
          %s711 = sand.u32 %s141, 1
          %s712 = scalar_lea.sflag [#allocation4], %s711
          %s713 = sand.u32 %s141, 1
          %s714 = smul.addr %s713, 128
          %s715 = scalar_lea.vmem [#allocation5], %s714
          %716 = dma.done %s712, 2048
        $region56: #{tpu_custom_call.1} parent=51 // pred_fallthru
          _
      $region52: #{tpu_custom_call.1} parent=5 // pred_fallthru
        _
    $region6: #{tpu_custom_call.1} parent=1 // loop_footer
      %s21 = sadd.s32 1, %s17
    $region7: #{tpu_custom_call.1} parent=1 // loop_footer_branch
      %16 = sbr.rel target = $region3
    $region8: #{tpu_custom_call.1} parent=1 // loop_exit
      _
    %717 = vsyncpa [#allocation3], 1
    %s718 = scalar_lea.sflag [#allocation3], 1
    %719 = vsyncpa %s718, 1
    %720 = vsyncpa [#allocation4], 1
    %s721 = scalar_lea.sflag [#allocation4], 1
    %722 = vsyncpa %s721, 1

</llo_original>
